<compile_context>
chip_gen: v6e
topology: v6e:2x2x1
jax: 0.10.0
libtpu: 0.0.40
codegen_flags: <defaults>
</compile_context>

<pallas_src>
from functools import partial

import jax
import jax.numpy as jnp
from jax import lax
from jax.experimental import pallas as pl
from jax.experimental.pallas import tpu as pltpu

ATTENTION_HEADS_PER_BLOCK = 4
EMBEDDING_SIZE = 128
HEAD_SIZE = EMBEDDING_SIZE // ATTENTION_HEADS_PER_BLOCK  # 32
SAMPLE_SIZE = 128           # max sequence length; T <= SAMPLE_SIZE
MAX_BLOCK_ROWS = 2048       # cap on Bb*T -> per-step VMEM stays well under limits


def fuse_head_weights(w_key, w_query, w_value):
    """Fuse the three (H, C) PyTorch-Linear weights into one (C, 3H) bf16 matrix.

    Done once at weight-load time (hoisted out of the per-call path)."""
    w = jnp.concatenate(
        [jnp.asarray(w_key).T, jnp.asarray(w_query).T, jnp.asarray(w_value).T],
        axis=1)                               # (C, 3H) f32
    return w.astype(jnp.bfloat16)             # MXU operands in bf16


def _head_kernel(x_ref, w_ref, o_ref):
    # x_ref: (Bb, T, C)   w_ref: (C, 3H) bf16   o_ref: (Bb, T, H)
    Bb, T, C = x_ref.shape
    H = HEAD_SIZE

    # One fused projection matmul for all Bb sequences and K/Q/V at once.
    x2d = x_ref[...].reshape(Bb * T, C).astype(jnp.bfloat16)
    kqv = jnp.dot(x2d, w_ref[...], preferred_element_type=jnp.float32)  # (Bb*T, 3H) f32
    kqv = kqv.reshape(Bb, T, 3 * H)

    scale = jnp.float32(EMBEDDING_SIZE) ** jnp.float32(-0.5)  # matches PyTorch C**-0.5
    k = kqv[:, :, 0:H].astype(jnp.bfloat16)                   # (Bb, T, H)
    q = (kqv[:, :, H:2 * H] * scale).astype(jnp.bfloat16)     # fold scale into q
    v = kqv[:, :, 2 * H:3 * H].astype(jnp.bfloat16)

    # Batched q @ k^T (bf16 MXU operands, f32 accumulation); contracts the
    # last axes of both operands so no k^T is materialized.
    s = jnp.einsum('bqd,bkd->bqk', q, k,
                   preferred_element_type=jnp.float32)        # (Bb, T, T) f32

    # Causal mask + softmax, batched over Bb (f32 VPU/EUP work).
    row = lax.broadcasted_iota(jnp.int32, (T, T), 0)
    col = lax.broadcasted_iota(jnp.int32, (T, T), 1)
    causal = col <= row                                       # (T, T), broadcast over Bb
    s = jnp.where(causal, s, -jnp.inf)
    m = jnp.max(s, axis=-1, keepdims=True)
    e = jnp.exp(s - m)
    denom = jnp.sum(e, axis=-1, keepdims=True)
    p = (e * pl.reciprocal(denom, approx=True)).astype(jnp.bfloat16)

    # Dropout: eval mode -> identity (see module-level TODO).

    out = jnp.einsum('bqk,bkd->bqd', p, v,
                     preferred_element_type=jnp.float32)      # (Bb, T, H) f32
    o_ref[...] = out.astype(o_ref.dtype)


def _tensorcores_per_chip():
    """Heuristic TC-per-chip count (v4/v5p/v7x are dual-core; v5e/v6e single)."""
    try:
        kind = jax.devices()[0].device_kind.lower()
    except Exception:  # pragma: no cover
        return 2
    if any(tag in kind for tag in ("v4", "v5p", "v7", "7x")):
        return 2
    return 1


def _pick_block_batch(B, T, n_cores):
    divisors = [bb for bb in (32, 16, 8, 4, 2, 1) if B % bb == 0]
    fits = [bb for bb in divisors if bb * T <= MAX_BLOCK_ROWS] or [divisors[-1]]
    if n_cores <= 1:
        # Single TensorCore: grid size buys nothing; take the largest block.
        return fits[0]
    # Dual TC: prefer an even number of grid steps >= 2 (balanced megacore split).
    for bb in fits:
        steps = B // bb
        if steps >= 2 and steps % 2 == 0:
            return bb
    for bb in fits:
        if B // bb >= 2:
            return bb
    return fits[0]


@partial(jax.jit, static_argnames=("block_b",))
def _head_forward_impl(x, w_kqv, *, block_b):
    B, T, C = x.shape
    H = HEAD_SIZE
    assert C == EMBEDDING_SIZE and T <= SAMPLE_SIZE
    assert w_kqv.shape == (C, 3 * H)
    assert B % block_b == 0

    return pl.pallas_call(
        _head_kernel,
        out_shape=jax.ShapeDtypeStruct((B, T, H), x.dtype),
        grid_spec=pltpu.PrefetchScalarGridSpec(
            num_scalar_prefetch=0,
            grid=(B // block_b,),
            in_specs=[
                pl.BlockSpec((block_b, T, C), lambda i: (i, 0, 0)),
                pl.BlockSpec((C, 3 * H), lambda i: (0, 0)),
            ],
            out_specs=pl.BlockSpec((block_b, T, H), lambda i: (i, 0, 0)),
        ),
        compiler_params=pltpu.CompilerParams(
            dimension_semantics=("parallel",),
            vmem_limit_bytes=32 * 1024 * 1024),
    )(x, w_kqv)


def head_forward(x, w_kqv):
    """x: (B, T, C) float32 or bfloat16.  w_kqv: fused (C, 3*head_size) weight
    (see fuse_head_weights).  Returns (B, T, head_size) in x.dtype."""
    B, T, _ = x.shape
    block_b = _pick_block_batch(B, T, _tensorcores_per_chip())
    return _head_forward_impl(x, w_kqv, block_b=block_b)


def head_reference(x, w_key, w_query, w_value):
    """Pure-JAX f32 reference matching the PyTorch forward (eval mode)."""
    B, T, C = x.shape
    x = x.astype(jnp.float32)
    k = x @ w_key.T
    q = x @ w_query.T
    v = x @ w_value.T
    aff = (q @ jnp.swapaxes(k, -2, -1)) * (C ** -0.5)
    mask = jnp.tril(jnp.ones((T, T), dtype=bool))
    aff = jnp.where(mask, aff, -jnp.inf)
    aff = jax.nn.softmax(aff, axis=-1)
    return aff @ v


if __name__ == "__main__":
    key = jax.random.PRNGKey(0)
    k_x, k_wk, k_wq, k_wv = jax.random.split(key, 4)

    C = EMBEDDING_SIZE
    bound = 1.0 / (C ** 0.5)
    w_key_p = jax.random.uniform(k_wk, (HEAD_SIZE, C), jnp.float32, -bound, bound)
    w_query_p = jax.random.uniform(k_wq, (HEAD_SIZE, C), jnp.float32, -bound, bound)
    w_value_p = jax.random.uniform(k_wv, (HEAD_SIZE, C), jnp.float32, -bound, bound)

    # Fuse/transpose/cast weights once (weight-load time), not per call.
    w_kqv = fuse_head_weights(w_key_p, w_query_p, w_value_p)

    # Config 1: f32 input, B=8, T=16.
    B, T = 8, 16
    x = jax.random.normal(k_x, (B, T, C), dtype=jnp.float32)
    out = jax.block_until_ready(head_forward(x, w_kqv))
    ref = head_reference(x, w_key_p, w_query_p, w_value_p)
    assert out.shape == (B, T, HEAD_SIZE)
    assert jnp.allclose(out, ref, atol=3e-2, rtol=3e-2), (
        "mismatch vs reference (config 1): max abs diff "
        f"{float(jnp.max(jnp.abs(out - ref)))}")

    # Config 2: small-batch path, B=2, T=8.
    B2, T2 = 2, 8
    x2 = jax.random.normal(jax.random.PRNGKey(1), (B2, T2, C), dtype=jnp.float32)
    out2 = jax.block_until_ready(head_forward(x2, w_kqv))
    ref2 = head_reference(x2, w_key_p, w_query_p, w_value_p)
    assert out2.shape == (B2, T2, HEAD_SIZE)
    assert jnp.allclose(out2, ref2, atol=3e-2, rtol=3e-2), (
        "mismatch vs reference (config 2): max abs diff "
        f"{float(jnp.max(jnp.abs(out2 - ref2)))}")

    # Config 3: bf16 input/output path (half the x HBM read, half the writeback).
    xb = x.astype(jnp.bfloat16)
    out3 = jax.block_until_ready(head_forward(xb, w_kqv))
    assert out3.shape == (B, T, HEAD_SIZE) and out3.dtype == jnp.bfloat16
    assert jnp.allclose(out3.astype(jnp.float32), ref, atol=7e-2, rtol=7e-2), (
        "mismatch vs reference (config 3, bf16): max abs diff "
        f"{float(jnp.max(jnp.abs(out3.astype(jnp.float32) - ref)))}")

    print("KERNEL_OK")
</pallas_src>

<mosaic_0001>
module attributes {stable_mosaic.version = 11 : i64} {
  func.func @_head_kernel(%arg0: i32, %arg1: memref<8x16x128xf32, #tpu.memory_space<vmem>>, %arg2: memref<128x96xbf16, #tpu.memory_space<vmem>>, %arg3: memref<8x16x32xf32, #tpu.memory_space<vmem>>) attributes {dimension_semantics = [#tpu.dimension_semantics<parallel>], iteration_bounds = array<i64: 1>, scalar_prefetch = 0 : i64, scratch_operands = 0 : i64, tpu.core_type = #tpu.core_type<tc>, window_params = [{transform_indices = @transform_0, window_bounds = array<i64: 8, 16, 128>}, {pipeline_mode = #tpu.pipeline_mode<synchronous>, transform_indices = @transform_1, window_bounds = array<i64: 128, 96>}, {transform_indices = @transform_2, window_bounds = array<i64: 8, 16, 32>}]} {
    %c0 = arith.constant 0 : index
    %c0_0 = arith.constant 0 : index
    %c0_1 = arith.constant 0 : index
    %0 = vector.load %arg1[%c0, %c0_0, %c0_1] : memref<8x16x128xf32, #tpu.memory_space<vmem>>, vector<8x16x128xf32>
    %1 = vector.shape_cast %0 : vector<8x16x128xf32> to vector<128x128xf32>
    %2 = arith.truncf %1 : vector<128x128xf32> to vector<128x128xbf16>
    %c0_2 = arith.constant 0 : index
    %c0_3 = arith.constant 0 : index
    %3 = vector.load %arg2[%c0_2, %c0_3] : memref<128x96xbf16, #tpu.memory_space<vmem>>, vector<128x96xbf16>
    %cst = arith.constant dense<0.000000e+00> : vector<128x96xf32>
    %4 = tpu.matmul %2, %3, %cst {dimension_numbers = #tpu.dot_dimension_numbers<[1], [0], [0], [1], [0, 0, 1, 1], [], []>} : vector<128x128xbf16>, vector<128x96xbf16>, vector<128x96xf32> -> vector<128x96xf32>
    %5 = vector.shape_cast %4 : vector<128x96xf32> to vector<8x16x96xf32>
    %cst_4 = arith.constant 1.280000e+02 : f32
    %cst_5 = arith.constant -5.000000e-01 : f32
    %6 = math.powf %cst_4, %cst_5 : f32
    %7 = vector.extract_strided_slice %5 {offsets = [0, 0, 0], sizes = [8, 16, 32], strides = [1, 1, 1]} : vector<8x16x96xf32> to vector<8x16x32xf32>
    %8 = arith.truncf %7 : vector<8x16x32xf32> to vector<8x16x32xbf16>
    %9 = vector.extract_strided_slice %5 {offsets = [0, 0, 32], sizes = [8, 16, 32], strides = [1, 1, 1]} : vector<8x16x96xf32> to vector<8x16x32xf32>
    %10 = vector.broadcast %6 : f32 to vector<8x16x32xf32>
    %11 = arith.mulf %9, %10 : vector<8x16x32xf32>
    %12 = arith.truncf %11 : vector<8x16x32xf32> to vector<8x16x32xbf16>
    %13 = vector.extract_strided_slice %5 {offsets = [0, 0, 64], sizes = [8, 16, 32], strides = [1, 1, 1]} : vector<8x16x96xf32> to vector<8x16x32xf32>
    %14 = arith.truncf %13 : vector<8x16x32xf32> to vector<8x16x32xbf16>
    "tpu.trace_start"() <{level = 10 : i32, message = "bqd,bkd->bqk"}> : () -> ()
    %cst_6 = arith.constant dense<0.000000e+00> : vector<8x16x16xf32>
    %15 = tpu.matmul %12, %8, %cst_6 {dimension_numbers = #tpu.dot_dimension_numbers<[2], [2], [1], [1], [0, 0, 0, 1, 1, 1], [0], [0]>} : vector<8x16x32xbf16>, vector<8x16x32xbf16>, vector<8x16x16xf32> -> vector<8x16x16xf32>
    "tpu.trace_stop"() : () -> ()
    %16 = tpu.iota {dimensions = array<i32: 0>} : vector<16x16xi32>
    %17 = tpu.iota {dimensions = array<i32: 1>} : vector<16x16xi32>
    %18 = arith.cmpi sle, %17, %16 : vector<16x16xi32>
    %cst_7 = arith.constant 0xFF800000 : f32
    %19 = vector.shape_cast %18 : vector<16x16xi1> to vector<1x16x16xi1>
    %20 = vector.broadcast %19 : vector<1x16x16xi1> to vector<8x16x16xi1>
    %21 = vector.broadcast %cst_7 : f32 to vector<8x16x16xf32>
    %22 = arith.select %20, %15, %21 : vector<8x16x16xi1>, vector<8x16x16xf32>
    %cst_8 = arith.constant dense<0xFF800000> : vector<8x16xf32>
    %23 = vector.multi_reduction <maximumf>, %22, %cst_8 [2] : vector<8x16x16xf32> to vector<8x16xf32>
    %24 = vector.shape_cast %23 : vector<8x16xf32> to vector<8x16x1xf32>
    %25 = vector.broadcast %24 : vector<8x16x1xf32> to vector<8x16x16xf32>
    %26 = arith.subf %22, %25 : vector<8x16x16xf32>
    %27 = math.exp %26 : vector<8x16x16xf32>
    %cst_9 = arith.constant dense<0.000000e+00> : vector<8x16xf32>
    %28 = vector.multi_reduction <add>, %27, %cst_9 [2] : vector<8x16x16xf32> to vector<8x16xf32>
    %29 = vector.shape_cast %28 : vector<8x16xf32> to vector<8x16x1xf32>
    %30 = tpu.reciprocal %29 {approx = true} : vector<8x16x1xf32> -> vector<8x16x1xf32>
    %31 = vector.broadcast %30 : vector<8x16x1xf32> to vector<8x16x16xf32>
    %32 = arith.mulf %27, %31 : vector<8x16x16xf32>
    %33 = arith.truncf %32 : vector<8x16x16xf32> to vector<8x16x16xbf16>
    "tpu.trace_start"() <{level = 10 : i32, message = "bqk,bkd->bqd"}> : () -> ()
    %cst_10 = arith.constant dense<0.000000e+00> : vector<8x16x32xf32>
    %34 = tpu.matmul %33, %14, %cst_10 {dimension_numbers = #tpu.dot_dimension_numbers<[2], [1], [1], [2], [0, 0, 0, 1, 1, 2], [0], [0]>} : vector<8x16x16xbf16>, vector<8x16x32xbf16>, vector<8x16x32xf32> -> vector<8x16x32xf32>
    "tpu.trace_stop"() : () -> ()
    %c0_11 = arith.constant 0 : index
    %c0_12 = arith.constant 0 : index
    %c0_13 = arith.constant 0 : index
    %35 = vector.load %arg3[%c0_11, %c0_12, %c0_13] : memref<8x16x32xf32, #tpu.memory_space<vmem>>, vector<8x16x32xf32>
    tpu.vector_store %arg3[%c0_11, %c0_12, %c0_13], %34 {strides = array<i32>} : memref<8x16x32xf32, #tpu.memory_space<vmem>>, vector<8x16x32xf32>,
    return
  }
  func.func @transform_0(%arg0: i32) -> (i32, i32, i32) {
    %c0_i32 = arith.constant 0 : i32
    %c0_i32_0 = arith.constant 0 : i32
    %c0_i32_1 = arith.constant 0 : i32
    return %arg0, %c0_i32, %c0_i32_0 : i32, i32, i32
  }
  func.func @transform_1(%arg0: i32) -> (i32, i32) {
    %c0_i32 = arith.constant 0 : i32
    %c0_i32_0 = arith.constant 0 : i32
    %c0_i32_1 = arith.constant 0 : i32
    return %c0_i32, %c0_i32_0 : i32, i32
  }
  func.func @transform_2(%arg0: i32) -> (i32, i32, i32) {
    %c0_i32 = arith.constant 0 : i32
    %c0_i32_0 = arith.constant 0 : i32
    %c0_i32_1 = arith.constant 0 : i32
    return %arg0, %c0_i32, %c0_i32_0 : i32, i32, i32
  }
}

</mosaic_0001>

<llo_original>
// kernel: _head_forward_impl.1
$region0: #{_head_forward_impl.1}
  #allocation0 [shape = 'u32[]', space=smem, size = 0x4, offset = 0x4, fixed_abs, tag = 'smem constant byte address 0x4 - core index']
  #allocation1 [shape = 'u32[144,128]{1,0:T(1,128)}', space=vmem, size = 0x12000, scoped, tag = 'internal scratch']
  %s0 = inlined_call_operand.hbm [shape: f32[8,16,128], index: 0, kind: input, shape index: {}]
  %s1 = inlined_call_operand.vmem [shape: bf16[128,96], index: 1, kind: input, shape index: {}]
  %s2 = inlined_call_operand.hbm [shape: f32[8,16,32], index: 2, kind: output, shape index: {}]
  %s3 = sld [smem:[#allocation0]]
  $region22: #{_head_forward_impl.1} parent=0
    _
  %s5 = ssub.s32 1, %s3
  %s6 = scalar_select 0, %s5, %s3
  $region1: #{_head_forward_impl.1} parent=0
    #allocation2 [shape = 'u8[65536]{0}', space=vmem, size = 0x10000, scoped, tag = 'input window, operand 0, single buffered']
    #allocation3 [shape = 's32[1]{0}', space=sflag, size = 0x4, scoped, tag = 'scoped memory for _head_forward_impl.1']
    #allocation4 [shape = 's32[1]{0}', space=sflag, size = 0x4, scoped, tag = 'scoped memory for _head_forward_impl.1']
    #allocation5 [shape = 'u8[65536]{0}', space=vmem, size = 0x10000, scoped, tag = 'output window, operand 0, single buffered']
    %7 = vsyncpa [#allocation3], 0
    %8 = vsyncpa [#allocation4], 0
    // Predicated region
    $region2: #{_head_forward_impl.1} parent=1 // pred_check
      _
    $region3: #{_head_forward_impl.1} parent=1 // pred_check_branch
      %10 = sbr.rel (0) target = $region5
    $region4: #{_head_forward_impl.1} parent=1 // pred_region
      %s12 = ssub.s32 2048, 2048
      %13 = vsyncadd [#allocation3], %s12
      %s14 = sshll.u32 [#allocation2], 4
      %s15 = int_to_ptr.vmem [resolvable:$true] %s14
      %20 = dma.hbm_to_vmem [thread:$0]  %s0, 2048, %s15, [#allocation3], 128, 128, 8
    $region5: #{_head_forward_impl.1} parent=1 // pred_fallthru
      _
    // Predicated region
    $region6: #{_head_forward_impl.1} parent=1 // pred_check
      _
    $region7: #{_head_forward_impl.1} parent=1 // pred_check_branch
      %22 = sbr.rel (0) target = $region9
    $region8: #{_head_forward_impl.1} parent=1 // pred_region
      _
    $region9: #{_head_forward_impl.1} parent=1 // pred_fallthru
      _
    // Predicated region
    $region10: #{_head_forward_impl.1} parent=1 // pred_check
      _
    $region11: #{_head_forward_impl.1} parent=1 // pred_check_branch
      %24 = sbr.rel (0) target = $region13
    $region12: #{_head_forward_impl.1} parent=1 // pred_region
      %25 = dma.done [#allocation3], 2048
    $region13: #{_head_forward_impl.1} parent=1 // pred_fallthru
      _
    %v27 = vld [vmem:[#allocation2] sm:$0xff]
    %v28 = vld [vmem:[#allocation2 + $0x8] sm:$0xff]
    %v29 = vld [vmem:[#allocation2 + $0x10] sm:$0xff]
    %v30 = vld [vmem:[#allocation2 + $0x18] sm:$0xff]
    %v31 = vld [vmem:[#allocation2 + $0x20] sm:$0xff]
    %v32 = vld [vmem:[#allocation2 + $0x28] sm:$0xff]
    %v33 = vld [vmem:[#allocation2 + $0x30] sm:$0xff]
    %v34 = vld [vmem:[#allocation2 + $0x38] sm:$0xff]
    %v35 = vld [vmem:[#allocation2 + $0x40] sm:$0xff]
    %v36 = vld [vmem:[#allocation2 + $0x48] sm:$0xff]
    %v37 = vld [vmem:[#allocation2 + $0x50] sm:$0xff]
    %v38 = vld [vmem:[#allocation2 + $0x58] sm:$0xff]
    %v39 = vld [vmem:[#allocation2 + $0x60] sm:$0xff]
    %v40 = vld [vmem:[#allocation2 + $0x68] sm:$0xff]
    %v41 = vld [vmem:[#allocation2 + $0x70] sm:$0xff]
    %v42 = vld [vmem:[#allocation2 + $0x78] sm:$0xff]
    %v43 = vpack.c.bf16 %v28, %v27
    %v44 = vpack.c.bf16 %v30, %v29
    %v45 = vpack.c.bf16 %v32, %v31
    %v46 = vpack.c.bf16 %v34, %v33
    %v47 = vpack.c.bf16 %v36, %v35
    %v48 = vpack.c.bf16 %v38, %v37
    %v49 = vpack.c.bf16 %v40, %v39
    %v50 = vpack.c.bf16 %v42, %v41
    %v51 = vld [vmem:[%s1] sm:$0xf]
    %v52 = vld [vmem:[%s1 + $0x4] sm:$0xf]
    %v53 = vld [vmem:[%s1 + $0x8] sm:$0xf]
    %v54 = vld [vmem:[%s1 + $0xc] sm:$0xf]
    %v55 = vld [vmem:[%s1 + $0x10] sm:$0xf]
    %v56 = vld [vmem:[%s1 + $0x14] sm:$0xf]
    %v57 = vld [vmem:[%s1 + $0x18] sm:$0xf]
    %v58 = vld [vmem:[%s1 + $0x1c] sm:$0xf]
    %v59 = vld [vmem:[%s1 + $0x20] sm:$0xf]
    %v60 = vld [vmem:[%s1 + $0x24] sm:$0xf]
    %v61 = vld [vmem:[%s1 + $0x28] sm:$0xf]
    %v62 = vld [vmem:[%s1 + $0x2c] sm:$0xf]
    %v63 = vld [vmem:[%s1 + $0x30] sm:$0xf]
    %v64 = vld [vmem:[%s1 + $0x34] sm:$0xf]
    %v65 = vld [vmem:[%s1 + $0x38] sm:$0xf]
    %v66 = vld [vmem:[%s1 + $0x3c] sm:$0xf]
    %v83 = vunpack.c.l.b16 %v51
    %v84 = vunpack.c.l.b16 %v52
    %v85 = vunpack.c.l.b16 %v53
    %v86 = vunpack.c.l.b16 %v54
    %v87 = vunpack.c.l.b16 %v55
    %v88 = vunpack.c.l.b16 %v56
    %v89 = vunpack.c.l.b16 %v57
    %v90 = vunpack.c.l.b16 %v58
    %v91 = vunpack.c.l.b16 %v59
    %v92 = vunpack.c.l.b16 %v60
    %v93 = vunpack.c.l.b16 %v61
    %v94 = vunpack.c.l.b16 %v62
    %v95 = vunpack.c.l.b16 %v63
    %v96 = vunpack.c.l.b16 %v64
    %v97 = vunpack.c.l.b16 %v65
    %v98 = vunpack.c.l.b16 %v66
    %v99 = vpack.c.b16 %v84, %v83
    %v100 = vpack.c.b16 %v86, %v85
    %v101 = vpack.c.b16 %v88, %v87
    %v102 = vpack.c.b16 %v90, %v89
    %v103 = vpack.c.b16 %v92, %v91
    %v104 = vpack.c.b16 %v94, %v93
    %v105 = vpack.c.b16 %v96, %v95
    %v106 = vpack.c.b16 %v98, %v97
    %115 = vmatprep.subr.bf16.mxu0 0
    %116 = vmatpush1.bf16.msra.mxu0 %v106
    %117 = vmatprep.subr.bf16.mxu0 0
    %118 = vmatpush1.bf16.msra.mxu0 %v105
    %119 = vmatprep.subr.bf16.mxu0 0
    %120 = vmatpush1.bf16.msra.mxu0 %v104
    %121 = vmatprep.subr.bf16.mxu0 0
    %122 = vmatpush1.bf16.msra.mxu0 %v103
    %123 = vmatprep.subr.bf16.mxu0 0
    %124 = vmatpush1.bf16.msra.mxu0 %v102
    %125 = vmatprep.subr.bf16.mxu0 0
    %126 = vmatpush1.bf16.msra.mxu0 %v101
    %127 = vmatprep.subr.bf16.mxu0 0
    %128 = vmatpush1.bf16.msra.mxu0 %v100
    %129 = vmatprep.subr.bf16.mxu0 0
    %130 = vmatpush1.bf16.msra.mxu0 %v99
    %131 = vmatprep.subr.bf16.mxu0 0
    %132 = vmatpush2.bf16.msra.mxu0 0
    %133 = vmatprep.subr.bf16.mxu0 0
    %134 = vmatpush2.bf16.msra.mxu0 0
    %135 = vmatprep.subr.bf16.mxu0 0
    %136 = vmatpush2.bf16.msra.mxu0 0
    %137 = vmatprep.subr.bf16.mxu0 0
    %138 = vmatpush2.bf16.msra.mxu0 0
    %139 = vmatprep.subr.bf16.mxu0 0
    %140 = vmatpush2.bf16.msra.mxu0 0
    %141 = vmatprep.subr.bf16.mxu0 0
    %142 = vmatpush2.bf16.msra.mxu0 0
    %143 = vmatprep.subr.bf16.mxu0 0
    %144 = vmatpush2.bf16.msra.mxu0 0
    %145 = vmatprep.subr.bf16.mxu0 0
    %146 = vmatpush2.bf16.msra.mxu0 0
    %147 = vmatprep.mubr.bf16.mxu0 0
    %148 = vmatmul.mubr.bf16.gmra.mxu0 %v43
    %v149 = vpop.f32.mrf.mxu0
    %v150 = vadd.f32 0.0, %v149
    %v151 = vpop.f32.mrf.mxu0
    %v152 = vpop.f32.mrf.mxu0
    %v153 = vadd.f32 0.0, %v152
    %v154 = vpop.f32.mrf.mxu0
    %155 = vmatprep.mubr.bf16.mxu0 0
    %156 = vmatmul.mubr.bf16.gmra.mxu0 %v44
    %v157 = vpop.f32.mrf.mxu0
    %v158 = vadd.f32 0.0, %v157
    %v159 = vpop.f32.mrf.mxu0
    %v160 = vpop.f32.mrf.mxu0
    %v161 = vadd.f32 0.0, %v160
    %v162 = vpop.f32.mrf.mxu0
    %163 = vmatprep.mubr.bf16.mxu0 0
    %164 = vmatmul.mubr.bf16.gmra.mxu0 %v45
    %v165 = vpop.f32.mrf.mxu0
    %v166 = vadd.f32 0.0, %v165
    %v167 = vpop.f32.mrf.mxu0
    %v168 = vpop.f32.mrf.mxu0
    %v169 = vadd.f32 0.0, %v168
    %v170 = vpop.f32.mrf.mxu0
    %171 = vmatprep.mubr.bf16.mxu0 0
    %172 = vmatmul.mubr.bf16.gmra.mxu0 %v46
    %v173 = vpop.f32.mrf.mxu0
    %v174 = vadd.f32 0.0, %v173
    %v175 = vpop.f32.mrf.mxu0
    %v176 = vpop.f32.mrf.mxu0
    %v177 = vadd.f32 0.0, %v176
    %v178 = vpop.f32.mrf.mxu0
    %179 = vmatprep.mubr.bf16.mxu0 0
    %180 = vmatmul.mubr.bf16.gmra.mxu0 %v47
    %v181 = vpop.f32.mrf.mxu0
    %v182 = vadd.f32 0.0, %v181
    %v183 = vpop.f32.mrf.mxu0
    %v184 = vpop.f32.mrf.mxu0
    %v185 = vadd.f32 0.0, %v184
    %v186 = vpop.f32.mrf.mxu0
    %187 = vmatprep.mubr.bf16.mxu0 0
    %188 = vmatmul.mubr.bf16.gmra.mxu0 %v48
    %v189 = vpop.f32.mrf.mxu0
    %v190 = vadd.f32 0.0, %v189
    %v191 = vpop.f32.mrf.mxu0
    %v192 = vpop.f32.mrf.mxu0
    %v193 = vadd.f32 0.0, %v192
    %v194 = vpop.f32.mrf.mxu0
    %195 = vmatprep.mubr.bf16.mxu0 0
    %196 = vmatmul.mubr.bf16.gmra.mxu0 %v49
    %v197 = vpop.f32.mrf.mxu0
    %v198 = vadd.f32 0.0, %v197
    %v199 = vpop.f32.mrf.mxu0
    %v200 = vpop.f32.mrf.mxu0
    %v201 = vadd.f32 0.0, %v200
    %v202 = vpop.f32.mrf.mxu0
    %203 = vmatprep.mubr.bf16.mxu0 0
    %204 = vmatmul.mubr.bf16.gmra.mxu0 %v50
    %v205 = vpop.f32.mrf.mxu0
    %v206 = vadd.f32 0.0, %v205
    %v207 = vpop.f32.mrf.mxu0
    %v208 = vpop.f32.mrf.mxu0
    %v209 = vadd.f32 0.0, %v208
    %v210 = vpop.f32.mrf.mxu0
    %211 = vdwg.mxu0
    %v212 = vpack.c.bf16 %v153, %v150
    %v213 = vpack.c.bf16 %v161, %v158
    %v214 = vpack.c.bf16 %v169, %v166
    %v215 = vpack.c.bf16 %v177, %v174
    %v216 = vpack.c.bf16 %v185, %v182
    %v217 = vpack.c.bf16 %v193, %v190
    %v218 = vpack.c.bf16 %v201, %v198
    %v219 = vpack.c.bf16 %v209, %v206
    %v220 = vmul.f32 %v150, 0.088388346
    %v221 = vmul.f32 %v153, 0.088388346
    %v222 = vmul.f32 %v158, 0.088388346
    %v223 = vmul.f32 %v161, 0.088388346
    %v224 = vmul.f32 %v166, 0.088388346
    %v225 = vmul.f32 %v169, 0.088388346
    %v226 = vmul.f32 %v174, 0.088388346
    %v227 = vmul.f32 %v177, 0.088388346
    %v228 = vmul.f32 %v182, 0.088388346
    %v229 = vmul.f32 %v185, 0.088388346
    %v230 = vmul.f32 %v190, 0.088388346
    %v231 = vmul.f32 %v193, 0.088388346
    %v232 = vmul.f32 %v198, 0.088388346
    %v233 = vmul.f32 %v201, 0.088388346
    %v234 = vmul.f32 %v206, 0.088388346
    %v235 = vmul.f32 %v209, 0.088388346
    %v236 = vpack.c.bf16 %v221, %v220
    %v237 = vpack.c.bf16 %v223, %v222
    %v238 = vpack.c.bf16 %v225, %v224
    %v239 = vpack.c.bf16 %v227, %v226
    %v240 = vpack.c.bf16 %v229, %v228
    %v241 = vpack.c.bf16 %v231, %v230
    %v242 = vpack.c.bf16 %v233, %v232
    %v243 = vpack.c.bf16 %v235, %v234
    %245 = vrot.lane.b32.xlu0 %v236, 96
    %v246 = vpop.permute.xlu0 %245
    %vm247 = vcmask 261120
    %v249 = vsel %vm247, %v246, 0
    %v252 = vsel %vm247, %v212, 0
    %254 = vmatprep.subr.bf16.mxu0 0
    %255 = vmatpush1.bf16.xpose.msra.mxu0 0
    %256 = vmatprep.subr.bf16.mxu0 0
    %257 = vmatpush1.bf16.xpose.msra.mxu0 0
    %258 = vmatprep.subr.bf16.mxu0 0
    %259 = vmatpush1.bf16.xpose.msra.mxu0 0
    %260 = vmatprep.subr.bf16.mxu0 0
    %261 = vmatpush1.bf16.xpose.msra.mxu0 0
    %262 = vmatprep.subr.bf16.mxu0 0
    %263 = vmatpush1.bf16.xpose.msra.mxu0 0
    %264 = vmatprep.subr.bf16.mxu0 0
    %265 = vmatpush1.bf16.xpose.msra.mxu0 0
    %266 = vmatprep.subr.bf16.mxu0 0
    %267 = vmatpush1.bf16.xpose.msra.mxu0 0
    %268 = vmatprep.subr.bf16.mxu0 0
    %269 = vmatpush1.bf16.xpose.msra.mxu0 %v252
    %270 = vmatprep.subr.bf16.mxu0 0
    %271 = vmatpush2.bf16.xpose.msra.mxu0 0
    %272 = vmatprep.subr.bf16.mxu0 0
    %273 = vmatpush2.bf16.xpose.msra.mxu0 0
    %274 = vmatprep.subr.bf16.mxu0 0
    %275 = vmatpush2.bf16.xpose.msra.mxu0 0
    %276 = vmatprep.subr.bf16.mxu0 0
    %277 = vmatpush2.bf16.xpose.msra.mxu0 0
    %278 = vmatprep.subr.bf16.mxu0 0
    %279 = vmatpush2.bf16.xpose.msra.mxu0 0
    %280 = vmatprep.subr.bf16.mxu0 0
    %281 = vmatpush2.bf16.xpose.msra.mxu0 0
    %282 = vmatprep.subr.bf16.mxu0 0
    %283 = vmatpush2.bf16.xpose.msra.mxu0 0
    %284 = vmatprep.subr.bf16.mxu0 0
    %285 = vmatpush2.bf16.xpose.msra.mxu0 0
    %286 = vmatprep.mubr.bf16.mxu0 0
    %287 = vmatmul.mubr.bf16.gmra.mxu0 %v249
    %v288 = vpop.f32.mrf.mxu0
    %v289 = vadd.f32 0.0, %v288
    %v290 = vpop.f32.mrf.mxu0
    %v291 = vpop.f32.mrf.mxu0
    %v292 = vadd.f32 0.0, %v291
    %v293 = vpop.f32.mrf.mxu0
    %294 = vdwg.mxu0
    %296 = vrot.lane.b32.xlu0 %v237, 96
    %v297 = vpop.permute.xlu0 %296
    %v299 = vsel %vm247, %v297, 0
    %v302 = vsel %vm247, %v213, 0
    %304 = vmatprep.subr.bf16.mxu0 0
    %305 = vmatpush1.bf16.xpose.msra.mxu0 0
    %306 = vmatprep.subr.bf16.mxu0 0
    %307 = vmatpush1.bf16.xpose.msra.mxu0 0
    %308 = vmatprep.subr.bf16.mxu0 0
    %309 = vmatpush1.bf16.xpose.msra.mxu0 0
    %310 = vmatprep.subr.bf16.mxu0 0
    %311 = vmatpush1.bf16.xpose.msra.mxu0 0
    %312 = vmatprep.subr.bf16.mxu0 0
    %313 = vmatpush1.bf16.xpose.msra.mxu0 0
    %314 = vmatprep.subr.bf16.mxu0 0
    %315 = vmatpush1.bf16.xpose.msra.mxu0 0
    %316 = vmatprep.subr.bf16.mxu0 0
    %317 = vmatpush1.bf16.xpose.msra.mxu0 0
    %318 = vmatprep.subr.bf16.mxu0 0
    %319 = vmatpush1.bf16.xpose.msra.mxu0 %v302
    %320 = vmatprep.subr.bf16.mxu0 0
    %321 = vmatpush2.bf16.xpose.msra.mxu0 0
    %322 = vmatprep.subr.bf16.mxu0 0
    %323 = vmatpush2.bf16.xpose.msra.mxu0 0
    %324 = vmatprep.subr.bf16.mxu0 0
    %325 = vmatpush2.bf16.xpose.msra.mxu0 0
    %326 = vmatprep.subr.bf16.mxu0 0
    %327 = vmatpush2.bf16.xpose.msra.mxu0 0
    %328 = vmatprep.subr.bf16.mxu0 0
    %329 = vmatpush2.bf16.xpose.msra.mxu0 0
    %330 = vmatprep.subr.bf16.mxu0 0
    %331 = vmatpush2.bf16.xpose.msra.mxu0 0
    %332 = vmatprep.subr.bf16.mxu0 0
    %333 = vmatpush2.bf16.xpose.msra.mxu0 0
    %334 = vmatprep.subr.bf16.mxu0 0
    %335 = vmatpush2.bf16.xpose.msra.mxu0 0
    %336 = vmatprep.mubr.bf16.mxu0 0
    %337 = vmatmul.mubr.bf16.gmra.mxu0 %v299
    %v338 = vpop.f32.mrf.mxu0
    %v339 = vadd.f32 0.0, %v338
    %v340 = vpop.f32.mrf.mxu0
    %v341 = vpop.f32.mrf.mxu0
    %v342 = vadd.f32 0.0, %v341
    %v343 = vpop.f32.mrf.mxu0
    %344 = vdwg.mxu0
    %346 = vrot.lane.b32.xlu0 %v238, 96
    %v347 = vpop.permute.xlu0 %346
    %v349 = vsel %vm247, %v347, 0
    %v352 = vsel %vm247, %v214, 0
    %354 = vmatprep.subr.bf16.mxu0 0
    %355 = vmatpush1.bf16.xpose.msra.mxu0 0
    %356 = vmatprep.subr.bf16.mxu0 0
    %357 = vmatpush1.bf16.xpose.msra.mxu0 0
    %358 = vmatprep.subr.bf16.mxu0 0
    %359 = vmatpush1.bf16.xpose.msra.mxu0 0
    %360 = vmatprep.subr.bf16.mxu0 0
    %361 = vmatpush1.bf16.xpose.msra.mxu0 0
    %362 = vmatprep.subr.bf16.mxu0 0
    %363 = vmatpush1.bf16.xpose.msra.mxu0 0
    %364 = vmatprep.subr.bf16.mxu0 0
    %365 = vmatpush1.bf16.xpose.msra.mxu0 0
    %366 = vmatprep.subr.bf16.mxu0 0
    %367 = vmatpush1.bf16.xpose.msra.mxu0 0
    %368 = vmatprep.subr.bf16.mxu0 0
    %369 = vmatpush1.bf16.xpose.msra.mxu0 %v352
    %370 = vmatprep.subr.bf16.mxu0 0
    %371 = vmatpush2.bf16.xpose.msra.mxu0 0
    %372 = vmatprep.subr.bf16.mxu0 0
    %373 = vmatpush2.bf16.xpose.msra.mxu0 0
    %374 = vmatprep.subr.bf16.mxu0 0
    %375 = vmatpush2.bf16.xpose.msra.mxu0 0
    %376 = vmatprep.subr.bf16.mxu0 0
    %377 = vmatpush2.bf16.xpose.msra.mxu0 0
    %378 = vmatprep.subr.bf16.mxu0 0
    %379 = vmatpush2.bf16.xpose.msra.mxu0 0
    %380 = vmatprep.subr.bf16.mxu0 0
    %381 = vmatpush2.bf16.xpose.msra.mxu0 0
    %382 = vmatprep.subr.bf16.mxu0 0
    %383 = vmatpush2.bf16.xpose.msra.mxu0 0
    %384 = vmatprep.subr.bf16.mxu0 0
    %385 = vmatpush2.bf16.xpose.msra.mxu0 0
    %386 = vmatprep.mubr.bf16.mxu0 0
    %387 = vmatmul.mubr.bf16.gmra.mxu0 %v349
    %v388 = vpop.f32.mrf.mxu0
    %v389 = vadd.f32 0.0, %v388
    %v390 = vpop.f32.mrf.mxu0
    %v391 = vpop.f32.mrf.mxu0
    %v392 = vadd.f32 0.0, %v391
    %v393 = vpop.f32.mrf.mxu0
    %394 = vdwg.mxu0
    %396 = vrot.lane.b32.xlu0 %v239, 96
    %v397 = vpop.permute.xlu0 %396
    %v399 = vsel %vm247, %v397, 0
    %v402 = vsel %vm247, %v215, 0
    %404 = vmatprep.subr.bf16.mxu0 0
    %405 = vmatpush1.bf16.xpose.msra.mxu0 0
    %406 = vmatprep.subr.bf16.mxu0 0
    %407 = vmatpush1.bf16.xpose.msra.mxu0 0
    %408 = vmatprep.subr.bf16.mxu0 0
    %409 = vmatpush1.bf16.xpose.msra.mxu0 0
    %410 = vmatprep.subr.bf16.mxu0 0
    %411 = vmatpush1.bf16.xpose.msra.mxu0 0
    %412 = vmatprep.subr.bf16.mxu0 0
    %413 = vmatpush1.bf16.xpose.msra.mxu0 0
    %414 = vmatprep.subr.bf16.mxu0 0
    %415 = vmatpush1.bf16.xpose.msra.mxu0 0
    %416 = vmatprep.subr.bf16.mxu0 0
    %417 = vmatpush1.bf16.xpose.msra.mxu0 0
    %418 = vmatprep.subr.bf16.mxu0 0
    %419 = vmatpush1.bf16.xpose.msra.mxu0 %v402
    %420 = vmatprep.subr.bf16.mxu0 0
    %421 = vmatpush2.bf16.xpose.msra.mxu0 0
    %422 = vmatprep.subr.bf16.mxu0 0
    %423 = vmatpush2.bf16.xpose.msra.mxu0 0
    %424 = vmatprep.subr.bf16.mxu0 0
    %425 = vmatpush2.bf16.xpose.msra.mxu0 0
    %426 = vmatprep.subr.bf16.mxu0 0
    %427 = vmatpush2.bf16.xpose.msra.mxu0 0
    %428 = vmatprep.subr.bf16.mxu0 0
    %429 = vmatpush2.bf16.xpose.msra.mxu0 0
    %430 = vmatprep.subr.bf16.mxu0 0
    %431 = vmatpush2.bf16.xpose.msra.mxu0 0
    %432 = vmatprep.subr.bf16.mxu0 0
    %433 = vmatpush2.bf16.xpose.msra.mxu0 0
    %434 = vmatprep.subr.bf16.mxu0 0
    %435 = vmatpush2.bf16.xpose.msra.mxu0 0
    %436 = vmatprep.mubr.bf16.mxu0 0
    %437 = vmatmul.mubr.bf16.gmra.mxu0 %v399
    %v438 = vpop.f32.mrf.mxu0
    %v439 = vadd.f32 0.0, %v438
    %v440 = vpop.f32.mrf.mxu0
    %v441 = vpop.f32.mrf.mxu0
    %v442 = vadd.f32 0.0, %v441
    %v443 = vpop.f32.mrf.mxu0
    %444 = vdwg.mxu0
    %446 = vrot.lane.b32.xlu0 %v240, 96
    %v447 = vpop.permute.xlu0 %446
    %v449 = vsel %vm247, %v447, 0
    %v452 = vsel %vm247, %v216, 0
    %454 = vmatprep.subr.bf16.mxu0 0
    %455 = vmatpush1.bf16.xpose.msra.mxu0 0
    %456 = vmatprep.subr.bf16.mxu0 0
    %457 = vmatpush1.bf16.xpose.msra.mxu0 0
    %458 = vmatprep.subr.bf16.mxu0 0
    %459 = vmatpush1.bf16.xpose.msra.mxu0 0
    %460 = vmatprep.subr.bf16.mxu0 0
    %461 = vmatpush1.bf16.xpose.msra.mxu0 0
    %462 = vmatprep.subr.bf16.mxu0 0
    %463 = vmatpush1.bf16.xpose.msra.mxu0 0
    %464 = vmatprep.subr.bf16.mxu0 0
    %465 = vmatpush1.bf16.xpose.msra.mxu0 0
    %466 = vmatprep.subr.bf16.mxu0 0
    %467 = vmatpush1.bf16.xpose.msra.mxu0 0
    %468 = vmatprep.subr.bf16.mxu0 0
    %469 = vmatpush1.bf16.xpose.msra.mxu0 %v452
    %470 = vmatprep.subr.bf16.mxu0 0
    %471 = vmatpush2.bf16.xpose.msra.mxu0 0
    %472 = vmatprep.subr.bf16.mxu0 0
    %473 = vmatpush2.bf16.xpose.msra.mxu0 0
    %474 = vmatprep.subr.bf16.mxu0 0
    %475 = vmatpush2.bf16.xpose.msra.mxu0 0
    %476 = vmatprep.subr.bf16.mxu0 0
    %477 = vmatpush2.bf16.xpose.msra.mxu0 0
    %478 = vmatprep.subr.bf16.mxu0 0
    %479 = vmatpush2.bf16.xpose.msra.mxu0 0
    %480 = vmatprep.subr.bf16.mxu0 0
    %481 = vmatpush2.bf16.xpose.msra.mxu0 0
    %482 = vmatprep.subr.bf16.mxu0 0
    %483 = vmatpush2.bf16.xpose.msra.mxu0 0
    %484 = vmatprep.subr.bf16.mxu0 0
    %485 = vmatpush2.bf16.xpose.msra.mxu0 0
    %486 = vmatprep.mubr.bf16.mxu0 0
    %487 = vmatmul.mubr.bf16.gmra.mxu0 %v449
    %v488 = vpop.f32.mrf.mxu0
    %v489 = vadd.f32 0.0, %v488
    %v490 = vpop.f32.mrf.mxu0
    %v491 = vpop.f32.mrf.mxu0
    %v492 = vadd.f32 0.0, %v491
    %v493 = vpop.f32.mrf.mxu0
    %494 = vdwg.mxu0
    %496 = vrot.lane.b32.xlu0 %v241, 96
    %v497 = vpop.permute.xlu0 %496
    %v499 = vsel %vm247, %v497, 0
    %v502 = vsel %vm247, %v217, 0
    %504 = vmatprep.subr.bf16.mxu0 0
    %505 = vmatpush1.bf16.xpose.msra.mxu0 0
    %506 = vmatprep.subr.bf16.mxu0 0
    %507 = vmatpush1.bf16.xpose.msra.mxu0 0
    %508 = vmatprep.subr.bf16.mxu0 0
    %509 = vmatpush1.bf16.xpose.msra.mxu0 0
    %510 = vmatprep.subr.bf16.mxu0 0
    %511 = vmatpush1.bf16.xpose.msra.mxu0 0
    %512 = vmatprep.subr.bf16.mxu0 0
    %513 = vmatpush1.bf16.xpose.msra.mxu0 0
    %514 = vmatprep.subr.bf16.mxu0 0
    %515 = vmatpush1.bf16.xpose.msra.mxu0 0
    %516 = vmatprep.subr.bf16.mxu0 0
    %517 = vmatpush1.bf16.xpose.msra.mxu0 0
    %518 = vmatprep.subr.bf16.mxu0 0
    %519 = vmatpush1.bf16.xpose.msra.mxu0 %v502
    %520 = vmatprep.subr.bf16.mxu0 0
    %521 = vmatpush2.bf16.xpose.msra.mxu0 0
    %522 = vmatprep.subr.bf16.mxu0 0
    %523 = vmatpush2.bf16.xpose.msra.mxu0 0
    %524 = vmatprep.subr.bf16.mxu0 0
    %525 = vmatpush2.bf16.xpose.msra.mxu0 0
    %526 = vmatprep.subr.bf16.mxu0 0
    %527 = vmatpush2.bf16.xpose.msra.mxu0 0
    %528 = vmatprep.subr.bf16.mxu0 0
    %529 = vmatpush2.bf16.xpose.msra.mxu0 0
    %530 = vmatprep.subr.bf16.mxu0 0
    %531 = vmatpush2.bf16.xpose.msra.mxu0 0
    %532 = vmatprep.subr.bf16.mxu0 0
    %533 = vmatpush2.bf16.xpose.msra.mxu0 0
    %534 = vmatprep.subr.bf16.mxu0 0
    %535 = vmatpush2.bf16.xpose.msra.mxu0 0
    %536 = vmatprep.mubr.bf16.mxu0 0
    %537 = vmatmul.mubr.bf16.gmra.mxu0 %v499
    %v538 = vpop.f32.mrf.mxu0
    %v539 = vadd.f32 0.0, %v538
    %v540 = vpop.f32.mrf.mxu0
    %v541 = vpop.f32.mrf.mxu0
    %v542 = vadd.f32 0.0, %v541
    %v543 = vpop.f32.mrf.mxu0
    %544 = vdwg.mxu0
    %546 = vrot.lane.b32.xlu0 %v242, 96
    %v547 = vpop.permute.xlu0 %546
    %v549 = vsel %vm247, %v547, 0
    %v552 = vsel %vm247, %v218, 0
    %554 = vmatprep.subr.bf16.mxu0 0
    %555 = vmatpush1.bf16.xpose.msra.mxu0 0
    %556 = vmatprep.subr.bf16.mxu0 0
    %557 = vmatpush1.bf16.xpose.msra.mxu0 0
    %558 = vmatprep.subr.bf16.mxu0 0
    %559 = vmatpush1.bf16.xpose.msra.mxu0 0
    %560 = vmatprep.subr.bf16.mxu0 0
    %561 = vmatpush1.bf16.xpose.msra.mxu0 0
    %562 = vmatprep.subr.bf16.mxu0 0
    %563 = vmatpush1.bf16.xpose.msra.mxu0 0
    %564 = vmatprep.subr.bf16.mxu0 0
    %565 = vmatpush1.bf16.xpose.msra.mxu0 0
    %566 = vmatprep.subr.bf16.mxu0 0
    %567 = vmatpush1.bf16.xpose.msra.mxu0 0
    %568 = vmatprep.subr.bf16.mxu0 0
    %569 = vmatpush1.bf16.xpose.msra.mxu0 %v552
    %570 = vmatprep.subr.bf16.mxu0 0
    %571 = vmatpush2.bf16.xpose.msra.mxu0 0
    %572 = vmatprep.subr.bf16.mxu0 0
    %573 = vmatpush2.bf16.xpose.msra.mxu0 0
    %574 = vmatprep.subr.bf16.mxu0 0
    %575 = vmatpush2.bf16.xpose.msra.mxu0 0
    %576 = vmatprep.subr.bf16.mxu0 0
    %577 = vmatpush2.bf16.xpose.msra.mxu0 0
    %578 = vmatprep.subr.bf16.mxu0 0
    %579 = vmatpush2.bf16.xpose.msra.mxu0 0
    %580 = vmatprep.subr.bf16.mxu0 0
    %581 = vmatpush2.bf16.xpose.msra.mxu0 0
    %582 = vmatprep.subr.bf16.mxu0 0
    %583 = vmatpush2.bf16.xpose.msra.mxu0 0
    %584 = vmatprep.subr.bf16.mxu0 0
    %585 = vmatpush2.bf16.xpose.msra.mxu0 0
    %586 = vmatprep.mubr.bf16.mxu0 0
    %587 = vmatmul.mubr.bf16.gmra.mxu0 %v549
    %v588 = vpop.f32.mrf.mxu0
    %v589 = vadd.f32 0.0, %v588
    %v590 = vpop.f32.mrf.mxu0
    %v591 = vpop.f32.mrf.mxu0
    %v592 = vadd.f32 0.0, %v591
    %v593 = vpop.f32.mrf.mxu0
    %594 = vdwg.mxu0
    %596 = vrot.lane.b32.xlu0 %v243, 96
    %v597 = vpop.permute.xlu0 %596
    %v599 = vsel %vm247, %v597, 0
    %v602 = vsel %vm247, %v219, 0
    %604 = vmatprep.subr.bf16.mxu0 0
    %605 = vmatpush1.bf16.xpose.msra.mxu0 0
    %606 = vmatprep.subr.bf16.mxu0 0
    %607 = vmatpush1.bf16.xpose.msra.mxu0 0
    %608 = vmatprep.subr.bf16.mxu0 0
    %609 = vmatpush1.bf16.xpose.msra.mxu0 0
    %610 = vmatprep.subr.bf16.mxu0 0
    %611 = vmatpush1.bf16.xpose.msra.mxu0 0
    %612 = vmatprep.subr.bf16.mxu0 0
    %613 = vmatpush1.bf16.xpose.msra.mxu0 0
    %614 = vmatprep.subr.bf16.mxu0 0
    %615 = vmatpush1.bf16.xpose.msra.mxu0 0
    %616 = vmatprep.subr.bf16.mxu0 0
    %617 = vmatpush1.bf16.xpose.msra.mxu0 0
    %618 = vmatprep.subr.bf16.mxu0 0
    %619 = vmatpush1.bf16.xpose.msra.mxu0 %v602
    %620 = vmatprep.subr.bf16.mxu0 0
    %621 = vmatpush2.bf16.xpose.msra.mxu0 0
    %622 = vmatprep.subr.bf16.mxu0 0
    %623 = vmatpush2.bf16.xpose.msra.mxu0 0
    %624 = vmatprep.subr.bf16.mxu0 0
    %625 = vmatpush2.bf16.xpose.msra.mxu0 0
    %626 = vmatprep.subr.bf16.mxu0 0
    %627 = vmatpush2.bf16.xpose.msra.mxu0 0
    %628 = vmatprep.subr.bf16.mxu0 0
    %629 = vmatpush2.bf16.xpose.msra.mxu0 0
    %630 = vmatprep.subr.bf16.mxu0 0
    %631 = vmatpush2.bf16.xpose.msra.mxu0 0
    %632 = vmatprep.subr.bf16.mxu0 0
    %633 = vmatpush2.bf16.xpose.msra.mxu0 0
    %634 = vmatprep.subr.bf16.mxu0 0
    %635 = vmatpush2.bf16.xpose.msra.mxu0 0
    %636 = vmatprep.mubr.bf16.mxu0 0
    %637 = vmatmul.mubr.bf16.gmra.mxu0 %v599
    %v638 = vpop.f32.mrf.mxu0
    %v639 = vadd.f32 0.0, %v638
    %v640 = vpop.f32.mrf.mxu0
    %v641 = vpop.f32.mrf.mxu0
    %v642 = vadd.f32 0.0, %v641
    %v643 = vpop.f32.mrf.mxu0
    %644 = vdwg.mxu0
    %v645 = vlaneseq
    %v646 = vshrl.u32 %v645, 7
    %v647 = vadd.s32 %v646, 8
    %v648 = vlaneseq
    %v649 = vand.u32 %v648, 127
    %vm650 = vcmp.le.s32.totalorder %v649, %v646
    %vm651 = vcmp.le.s32.totalorder %v649, %v647
    %v652 = vsel %vm650, 1, 0
    %v653 = vsel %vm651, 1, 0
    %vm654 = vcmp.eq.s32.totalorder %v652, 1
    %vm655 = vcmp.eq.s32.totalorder %v653, 1
    %v656 = vsel %vm654, %v289, -inf
    %v657 = vsel %vm655, %v292, -inf
    %v658 = vsel %vm654, %v339, -inf
    %v659 = vsel %vm655, %v342, -inf
    %v660 = vsel %vm654, %v389, -inf
    %v661 = vsel %vm655, %v392, -inf
    %v662 = vsel %vm654, %v439, -inf
    %v663 = vsel %vm655, %v442, -inf
    %v664 = vsel %vm654, %v489, -inf
    %v665 = vsel %vm655, %v492, -inf
    %v666 = vsel %vm654, %v539, -inf
    %v667 = vsel %vm655, %v542, -inf
    %v668 = vsel %vm654, %v589, -inf
    %v669 = vsel %vm655, %v592, -inf
    %v670 = vsel %vm654, %v639, -inf
    %v671 = vsel %vm655, %v642, -inf
    %vm672 = vcmask 130048
    %v673 = vsel %vm672, %v656, -inf
    %674 = vmax.xlane.f32.xlu0 %v673
    %v675 = vpop.xlane.xlu0 %674
    %v676 = vsel %vm672, %v657, -inf
    %677 = vmax.xlane.f32.xlu0 %v676
    %v678 = vpop.xlane.xlu0 %677
    %v679 = vsel %vm672, %v658, -inf
    %680 = vmax.xlane.f32.xlu0 %v679
    %v681 = vpop.xlane.xlu0 %680
    %v682 = vsel %vm672, %v659, -inf
    %683 = vmax.xlane.f32.xlu0 %v682
    %v684 = vpop.xlane.xlu0 %683
    %v685 = vsel %vm672, %v660, -inf
    %686 = vmax.xlane.f32.xlu0 %v685
    %v687 = vpop.xlane.xlu0 %686
    %v688 = vsel %vm672, %v661, -inf
    %689 = vmax.xlane.f32.xlu0 %v688
    %v690 = vpop.xlane.xlu0 %689
    %v691 = vsel %vm672, %v662, -inf
    %692 = vmax.xlane.f32.xlu0 %v691
    %v693 = vpop.xlane.xlu0 %692
    %v694 = vsel %vm672, %v663, -inf
    %695 = vmax.xlane.f32.xlu0 %v694
    %v696 = vpop.xlane.xlu0 %695
    %v697 = vsel %vm672, %v664, -inf
    %698 = vmax.xlane.f32.xlu0 %v697
    %v699 = vpop.xlane.xlu0 %698
    %v700 = vsel %vm672, %v665, -inf
    %701 = vmax.xlane.f32.xlu0 %v700
    %v702 = vpop.xlane.xlu0 %701
    %v703 = vsel %vm672, %v666, -inf
    %704 = vmax.xlane.f32.xlu0 %v703
    %v705 = vpop.xlane.xlu0 %704
    %v706 = vsel %vm672, %v667, -inf
    %707 = vmax.xlane.f32.xlu0 %v706
    %v708 = vpop.xlane.xlu0 %707
    %v709 = vsel %vm672, %v668, -inf
    %710 = vmax.xlane.f32.xlu0 %v709
    %v711 = vpop.xlane.xlu0 %710
    %v712 = vsel %vm672, %v669, -inf
    %713 = vmax.xlane.f32.xlu0 %v712
    %v714 = vpop.xlane.xlu0 %713
    %v715 = vsel %vm672, %v670, -inf
    %716 = vmax.xlane.f32.xlu0 %v715
    %v717 = vpop.xlane.xlu0 %716
    %v718 = vsel %vm672, %v671, -inf
    %719 = vmax.xlane.f32.xlu0 %v718
    %v720 = vpop.xlane.xlu0 %719
    %v721 = vsub.f32 %v656, %v675
    %v722 = vsub.f32 %v657, %v678
    %v723 = vsub.f32 %v658, %v681
    %v724 = vsub.f32 %v659, %v684
    %v725 = vsub.f32 %v660, %v687
    %v726 = vsub.f32 %v661, %v690
    %v727 = vsub.f32 %v662, %v693
    %v728 = vsub.f32 %v663, %v696
    %v729 = vsub.f32 %v664, %v699
    %v730 = vsub.f32 %v665, %v702
    %v731 = vsub.f32 %v666, %v705
    %v732 = vsub.f32 %v667, %v708
    %v733 = vsub.f32 %v668, %v711
    %v734 = vsub.f32 %v669, %v714
    %v735 = vsub.f32 %v670, %v717
    %v736 = vsub.f32 %v671, %v720
    %v737 = vmul.f32 %v721, 1.442695
    %v738 = vpow.pop %v737
    %v739 = vmul.f32 %v722, 1.442695
    %v740 = vpow.pop %v739
    %v741 = vmul.f32 %v723, 1.442695
    %v742 = vpow.pop %v741
    %v743 = vmul.f32 %v724, 1.442695
    %v744 = vpow.pop %v743
    %v745 = vmul.f32 %v725, 1.442695
    %v746 = vpow.pop %v745
    %v747 = vmul.f32 %v726, 1.442695
    %v748 = vpow.pop %v747
    %v749 = vmul.f32 %v727, 1.442695
    %v750 = vpow.pop %v749
    %v751 = vmul.f32 %v728, 1.442695
    %v752 = vpow.pop %v751
    %v753 = vmul.f32 %v729, 1.442695
    %v754 = vpow.pop %v753
    %v755 = vmul.f32 %v730, 1.442695
    %v756 = vpow.pop %v755
    %v757 = vmul.f32 %v731, 1.442695
    %v758 = vpow.pop %v757
    %v759 = vmul.f32 %v732, 1.442695
    %v760 = vpow.pop %v759
    %v761 = vmul.f32 %v733, 1.442695
    %v762 = vpow.pop %v761
    %v763 = vmul.f32 %v734, 1.442695
    %v764 = vpow.pop %v763
    %v765 = vmul.f32 %v735, 1.442695
    %v766 = vpow.pop %v765
    %v767 = vmul.f32 %v736, 1.442695
    %v768 = vpow.pop %v767
    %v769 = vsel %vm672, %v738, 0.0
    %770 = vadd.xlane.f32.xlu0 %v769
    %v771 = vpop.xlane.xlu0 %770
    %v772 = vsel %vm672, %v740, 0.0
    %773 = vadd.xlane.f32.xlu0 %v772
    %v774 = vpop.xlane.xlu0 %773
    %v775 = vsel %vm672, %v742, 0.0
    %776 = vadd.xlane.f32.xlu0 %v775
    %v777 = vpop.xlane.xlu0 %776
    %v778 = vsel %vm672, %v744, 0.0
    %779 = vadd.xlane.f32.xlu0 %v778
    %v780 = vpop.xlane.xlu0 %779
    %v781 = vsel %vm672, %v746, 0.0
    %782 = vadd.xlane.f32.xlu0 %v781
    %v783 = vpop.xlane.xlu0 %782
    %v784 = vsel %vm672, %v748, 0.0
    %785 = vadd.xlane.f32.xlu0 %v784
    %v786 = vpop.xlane.xlu0 %785
    %v787 = vsel %vm672, %v750, 0.0
    %788 = vadd.xlane.f32.xlu0 %v787
    %v789 = vpop.xlane.xlu0 %788
    %v790 = vsel %vm672, %v752, 0.0
    %791 = vadd.xlane.f32.xlu0 %v790
    %v792 = vpop.xlane.xlu0 %791
    %v793 = vsel %vm672, %v754, 0.0
    %794 = vadd.xlane.f32.xlu0 %v793
    %v795 = vpop.xlane.xlu0 %794
    %v796 = vsel %vm672, %v756, 0.0
    %797 = vadd.xlane.f32.xlu0 %v796
    %v798 = vpop.xlane.xlu0 %797
    %v799 = vsel %vm672, %v758, 0.0
    %800 = vadd.xlane.f32.xlu0 %v799
    %v801 = vpop.xlane.xlu0 %800
    %v802 = vsel %vm672, %v760, 0.0
    %803 = vadd.xlane.f32.xlu0 %v802
    %v804 = vpop.xlane.xlu0 %803
    %v805 = vsel %vm672, %v762, 0.0
    %806 = vadd.xlane.f32.xlu0 %v805
    %v807 = vpop.xlane.xlu0 %806
    %v808 = vsel %vm672, %v764, 0.0
    %809 = vadd.xlane.f32.xlu0 %v808
    %v810 = vpop.xlane.xlu0 %809
    %v811 = vsel %vm672, %v766, 0.0
    %812 = vadd.xlane.f32.xlu0 %v811
    %v813 = vpop.xlane.xlu0 %812
    %v814 = vsel %vm672, %v768, 0.0
    %815 = vadd.xlane.f32.xlu0 %v814
    %v816 = vpop.xlane.xlu0 %815
    %v817 = vrcp.pop %v771
    %v818 = vrcp.pop %v774
    %v819 = vrcp.pop %v777
    %v820 = vrcp.pop %v780
    %v821 = vrcp.pop %v783
    %v822 = vrcp.pop %v786
    %v823 = vrcp.pop %v789
    %v824 = vrcp.pop %v792
    %v825 = vrcp.pop %v795
    %v826 = vrcp.pop %v798
    %v827 = vrcp.pop %v801
    %v828 = vrcp.pop %v804
    %v829 = vrcp.pop %v807
    %v830 = vrcp.pop %v810
    %v831 = vrcp.pop %v813
    %v832 = vrcp.pop %v816
    %v833 = vmul.f32 %v738, %v817
    %v834 = vmul.f32 %v740, %v818
    %v835 = vmul.f32 %v742, %v819
    %v836 = vmul.f32 %v744, %v820
    %v837 = vmul.f32 %v746, %v821
    %v838 = vmul.f32 %v748, %v822
    %v839 = vmul.f32 %v750, %v823
    %v840 = vmul.f32 %v752, %v824
    %v841 = vmul.f32 %v754, %v825
    %v842 = vmul.f32 %v756, %v826
    %v843 = vmul.f32 %v758, %v827
    %v844 = vmul.f32 %v760, %v828
    %v845 = vmul.f32 %v762, %v829
    %v846 = vmul.f32 %v764, %v830
    %v847 = vmul.f32 %v766, %v831
    %v848 = vmul.f32 %v768, %v832
    %v849 = vpack.c.bf16 %v834, %v833
    %v850 = vpack.c.bf16 %v836, %v835
    %v851 = vpack.c.bf16 %v838, %v837
    %v852 = vpack.c.bf16 %v840, %v839
    %v853 = vpack.c.bf16 %v842, %v841
    %v854 = vpack.c.bf16 %v844, %v843
    %v855 = vpack.c.bf16 %v846, %v845
    %v856 = vpack.c.bf16 %v848, %v847
    %858 = vrot.lane.b32.xlu0 %v212, 64
    %v859 = vpop.permute.xlu0 %858
    %v862 = vsel %vm672, %v849, 0
    %864 = vmatprep.subr.bf16.mxu0 0
    %865 = vmatpush1.bf16.msra.mxu0 0
    %866 = vmatprep.subr.bf16.mxu0 0
    %867 = vmatpush1.bf16.msra.mxu0 0
    %868 = vmatprep.subr.bf16.mxu0 0
    %869 = vmatpush1.bf16.msra.mxu0 0
    %870 = vmatprep.subr.bf16.mxu0 0
    %871 = vmatpush1.bf16.msra.mxu0 0
    %872 = vmatprep.subr.bf16.mxu0 0
    %873 = vmatpush1.bf16.msra.mxu0 0
    %874 = vmatprep.subr.bf16.mxu0 0
    %875 = vmatpush1.bf16.msra.mxu0 0
    %876 = vmatprep.subr.bf16.mxu0 0
    %877 = vmatpush1.bf16.msra.mxu0 0
    %878 = vmatprep.subr.bf16.mxu0 0
    %879 = vmatpush1.bf16.msra.mxu0 %v859
    %880 = vmatprep.subr.bf16.mxu0 0
    %881 = vmatpush2.bf16.msra.mxu0 0
    %882 = vmatprep.subr.bf16.mxu0 0
    %883 = vmatpush2.bf16.msra.mxu0 0
    %884 = vmatprep.subr.bf16.mxu0 0
    %885 = vmatpush2.bf16.msra.mxu0 0
    %886 = vmatprep.subr.bf16.mxu0 0
    %887 = vmatpush2.bf16.msra.mxu0 0
    %888 = vmatprep.subr.bf16.mxu0 0
    %889 = vmatpush2.bf16.msra.mxu0 0
    %890 = vmatprep.subr.bf16.mxu0 0
    %891 = vmatpush2.bf16.msra.mxu0 0
    %892 = vmatprep.subr.bf16.mxu0 0
    %893 = vmatpush2.bf16.msra.mxu0 0
    %894 = vmatprep.subr.bf16.mxu0 0
    %895 = vmatpush2.bf16.msra.mxu0 0
    %896 = vmatprep.mubr.bf16.mxu0 0
    %897 = vmatmul.mubr.bf16.gmra.mxu0 %v862
    %v898 = vpop.f32.mrf.mxu0
    %v899 = vadd.f32 0.0, %v898
    %v900 = vpop.f32.mrf.mxu0
    %v901 = vpop.f32.mrf.mxu0
    %v902 = vadd.f32 0.0, %v901
    %v903 = vpop.f32.mrf.mxu0
    %904 = vdwg.mxu0
    %906 = vrot.lane.b32.xlu0 %v213, 64
    %v907 = vpop.permute.xlu0 %906
    %v910 = vsel %vm672, %v850, 0
    %912 = vmatprep.subr.bf16.mxu0 0
    %913 = vmatpush1.bf16.msra.mxu0 0
    %914 = vmatprep.subr.bf16.mxu0 0
    %915 = vmatpush1.bf16.msra.mxu0 0
    %916 = vmatprep.subr.bf16.mxu0 0
    %917 = vmatpush1.bf16.msra.mxu0 0
    %918 = vmatprep.subr.bf16.mxu0 0
    %919 = vmatpush1.bf16.msra.mxu0 0
    %920 = vmatprep.subr.bf16.mxu0 0
    %921 = vmatpush1.bf16.msra.mxu0 0
    %922 = vmatprep.subr.bf16.mxu0 0
    %923 = vmatpush1.bf16.msra.mxu0 0
    %924 = vmatprep.subr.bf16.mxu0 0
    %925 = vmatpush1.bf16.msra.mxu0 0
    %926 = vmatprep.subr.bf16.mxu0 0
    %927 = vmatpush1.bf16.msra.mxu0 %v907
    %928 = vmatprep.subr.bf16.mxu0 0
    %929 = vmatpush2.bf16.msra.mxu0 0
    %930 = vmatprep.subr.bf16.mxu0 0
    %931 = vmatpush2.bf16.msra.mxu0 0
    %932 = vmatprep.subr.bf16.mxu0 0
    %933 = vmatpush2.bf16.msra.mxu0 0
    %934 = vmatprep.subr.bf16.mxu0 0
    %935 = vmatpush2.bf16.msra.mxu0 0
    %936 = vmatprep.subr.bf16.mxu0 0
    %937 = vmatpush2.bf16.msra.mxu0 0
    %938 = vmatprep.subr.bf16.mxu0 0
    %939 = vmatpush2.bf16.msra.mxu0 0
    %940 = vmatprep.subr.bf16.mxu0 0
    %941 = vmatpush2.bf16.msra.mxu0 0
    %942 = vmatprep.subr.bf16.mxu0 0
    %943 = vmatpush2.bf16.msra.mxu0 0
    %944 = vmatprep.mubr.bf16.mxu0 0
    %945 = vmatmul.mubr.bf16.gmra.mxu0 %v910
    %v946 = vpop.f32.mrf.mxu0
    %v947 = vadd.f32 0.0, %v946
    %v948 = vpop.f32.mrf.mxu0
    %v949 = vpop.f32.mrf.mxu0
    %v950 = vadd.f32 0.0, %v949
    %v951 = vpop.f32.mrf.mxu0
    %952 = vdwg.mxu0
    %954 = vrot.lane.b32.xlu0 %v214, 64
    %v955 = vpop.permute.xlu0 %954
    %v958 = vsel %vm672, %v851, 0
    %960 = vmatprep.subr.bf16.mxu0 0
    %961 = vmatpush1.bf16.msra.mxu0 0
    %962 = vmatprep.subr.bf16.mxu0 0
    %963 = vmatpush1.bf16.msra.mxu0 0
    %964 = vmatprep.subr.bf16.mxu0 0
    %965 = vmatpush1.bf16.msra.mxu0 0
    %966 = vmatprep.subr.bf16.mxu0 0
    %967 = vmatpush1.bf16.msra.mxu0 0
    %968 = vmatprep.subr.bf16.mxu0 0
    %969 = vmatpush1.bf16.msra.mxu0 0
    %970 = vmatprep.subr.bf16.mxu0 0
    %971 = vmatpush1.bf16.msra.mxu0 0
    %972 = vmatprep.subr.bf16.mxu0 0
    %973 = vmatpush1.bf16.msra.mxu0 0
    %974 = vmatprep.subr.bf16.mxu0 0
    %975 = vmatpush1.bf16.msra.mxu0 %v955
    %976 = vmatprep.subr.bf16.mxu0 0
    %977 = vmatpush2.bf16.msra.mxu0 0
    %978 = vmatprep.subr.bf16.mxu0 0
    %979 = vmatpush2.bf16.msra.mxu0 0
    %980 = vmatprep.subr.bf16.mxu0 0
    %981 = vmatpush2.bf16.msra.mxu0 0
    %982 = vmatprep.subr.bf16.mxu0 0
    %983 = vmatpush2.bf16.msra.mxu0 0
    %984 = vmatprep.subr.bf16.mxu0 0
    %985 = vmatpush2.bf16.msra.mxu0 0
    %986 = vmatprep.subr.bf16.mxu0 0
    %987 = vmatpush2.bf16.msra.mxu0 0
    %988 = vmatprep.subr.bf16.mxu0 0
    %989 = vmatpush2.bf16.msra.mxu0 0
    %990 = vmatprep.subr.bf16.mxu0 0
    %991 = vmatpush2.bf16.msra.mxu0 0
    %992 = vmatprep.mubr.bf16.mxu0 0
    %993 = vmatmul.mubr.bf16.gmra.mxu0 %v958
    %v994 = vpop.f32.mrf.mxu0
    %v995 = vadd.f32 0.0, %v994
    %v996 = vpop.f32.mrf.mxu0
    %v997 = vpop.f32.mrf.mxu0
    %v998 = vadd.f32 0.0, %v997
    %v999 = vpop.f32.mrf.mxu0
    %1000 = vdwg.mxu0
    %1002 = vrot.lane.b32.xlu0 %v215, 64
    %v1003 = vpop.permute.xlu0 %1002
    %v1006 = vsel %vm672, %v852, 0
    %1008 = vmatprep.subr.bf16.mxu0 0
    %1009 = vmatpush1.bf16.msra.mxu0 0
    %1010 = vmatprep.subr.bf16.mxu0 0
    %1011 = vmatpush1.bf16.msra.mxu0 0
    %1012 = vmatprep.subr.bf16.mxu0 0
    %1013 = vmatpush1.bf16.msra.mxu0 0
    %1014 = vmatprep.subr.bf16.mxu0 0
    %1015 = vmatpush1.bf16.msra.mxu0 0
    %1016 = vmatprep.subr.bf16.mxu0 0
    %1017 = vmatpush1.bf16.msra.mxu0 0
    %1018 = vmatprep.subr.bf16.mxu0 0
    %1019 = vmatpush1.bf16.msra.mxu0 0
    %1020 = vmatprep.subr.bf16.mxu0 0
    %1021 = vmatpush1.bf16.msra.mxu0 0
    %1022 = vmatprep.subr.bf16.mxu0 0
    %1023 = vmatpush1.bf16.msra.mxu0 %v1003
    %1024 = vmatprep.subr.bf16.mxu0 0
    %1025 = vmatpush2.bf16.msra.mxu0 0
    %1026 = vmatprep.subr.bf16.mxu0 0
    %1027 = vmatpush2.bf16.msra.mxu0 0
    %1028 = vmatprep.subr.bf16.mxu0 0
    %1029 = vmatpush2.bf16.msra.mxu0 0
    %1030 = vmatprep.subr.bf16.mxu0 0
    %1031 = vmatpush2.bf16.msra.mxu0 0
    %1032 = vmatprep.subr.bf16.mxu0 0
    %1033 = vmatpush2.bf16.msra.mxu0 0
    %1034 = vmatprep.subr.bf16.mxu0 0
    %1035 = vmatpush2.bf16.msra.mxu0 0
    %1036 = vmatprep.subr.bf16.mxu0 0
    %1037 = vmatpush2.bf16.msra.mxu0 0
    %1038 = vmatprep.subr.bf16.mxu0 0
    %1039 = vmatpush2.bf16.msra.mxu0 0
    %1040 = vmatprep.mubr.bf16.mxu0 0
    %1041 = vmatmul.mubr.bf16.gmra.mxu0 %v1006
    %v1042 = vpop.f32.mrf.mxu0
    %v1043 = vadd.f32 0.0, %v1042
    %v1044 = vpop.f32.mrf.mxu0
    %v1045 = vpop.f32.mrf.mxu0
    %v1046 = vadd.f32 0.0, %v1045
    %v1047 = vpop.f32.mrf.mxu0
    %1048 = vdwg.mxu0
    %1050 = vrot.lane.b32.xlu0 %v216, 64
    %v1051 = vpop.permute.xlu0 %1050
    %v1054 = vsel %vm672, %v853, 0
    %1056 = vmatprep.subr.bf16.mxu0 0
    %1057 = vmatpush1.bf16.msra.mxu0 0
    %1058 = vmatprep.subr.bf16.mxu0 0
    %1059 = vmatpush1.bf16.msra.mxu0 0
    %1060 = vmatprep.subr.bf16.mxu0 0
    %1061 = vmatpush1.bf16.msra.mxu0 0
    %1062 = vmatprep.subr.bf16.mxu0 0
    %1063 = vmatpush1.bf16.msra.mxu0 0
    %1064 = vmatprep.subr.bf16.mxu0 0
    %1065 = vmatpush1.bf16.msra.mxu0 0
    %1066 = vmatprep.subr.bf16.mxu0 0
    %1067 = vmatpush1.bf16.msra.mxu0 0
    %1068 = vmatprep.subr.bf16.mxu0 0
    %1069 = vmatpush1.bf16.msra.mxu0 0
    %1070 = vmatprep.subr.bf16.mxu0 0
    %1071 = vmatpush1.bf16.msra.mxu0 %v1051
    %1072 = vmatprep.subr.bf16.mxu0 0
    %1073 = vmatpush2.bf16.msra.mxu0 0
    %1074 = vmatprep.subr.bf16.mxu0 0
    %1075 = vmatpush2.bf16.msra.mxu0 0
    %1076 = vmatprep.subr.bf16.mxu0 0
    %1077 = vmatpush2.bf16.msra.mxu0 0
    %1078 = vmatprep.subr.bf16.mxu0 0
    %1079 = vmatpush2.bf16.msra.mxu0 0
    %1080 = vmatprep.subr.bf16.mxu0 0
    %1081 = vmatpush2.bf16.msra.mxu0 0
    %1082 = vmatprep.subr.bf16.mxu0 0
    %1083 = vmatpush2.bf16.msra.mxu0 0
    %1084 = vmatprep.subr.bf16.mxu0 0
    %1085 = vmatpush2.bf16.msra.mxu0 0
    %1086 = vmatprep.subr.bf16.mxu0 0
    %1087 = vmatpush2.bf16.msra.mxu0 0
    %1088 = vmatprep.mubr.bf16.mxu0 0
    %1089 = vmatmul.mubr.bf16.gmra.mxu0 %v1054
    %v1090 = vpop.f32.mrf.mxu0
    %v1091 = vadd.f32 0.0, %v1090
    %v1092 = vpop.f32.mrf.mxu0
    %v1093 = vpop.f32.mrf.mxu0
    %v1094 = vadd.f32 0.0, %v1093
    %v1095 = vpop.f32.mrf.mxu0
    %1096 = vdwg.mxu0
    %1098 = vrot.lane.b32.xlu0 %v217, 64
    %v1099 = vpop.permute.xlu0 %1098
    %v1102 = vsel %vm672, %v854, 0
    %1104 = vmatprep.subr.bf16.mxu0 0
    %1105 = vmatpush1.bf16.msra.mxu0 0
    %1106 = vmatprep.subr.bf16.mxu0 0
    %1107 = vmatpush1.bf16.msra.mxu0 0
    %1108 = vmatprep.subr.bf16.mxu0 0
    %1109 = vmatpush1.bf16.msra.mxu0 0
    %1110 = vmatprep.subr.bf16.mxu0 0
    %1111 = vmatpush1.bf16.msra.mxu0 0
    %1112 = vmatprep.subr.bf16.mxu0 0
    %1113 = vmatpush1.bf16.msra.mxu0 0
    %1114 = vmatprep.subr.bf16.mxu0 0
    %1115 = vmatpush1.bf16.msra.mxu0 0
    %1116 = vmatprep.subr.bf16.mxu0 0
    %1117 = vmatpush1.bf16.msra.mxu0 0
    %1118 = vmatprep.subr.bf16.mxu0 0
    %1119 = vmatpush1.bf16.msra.mxu0 %v1099
    %1120 = vmatprep.subr.bf16.mxu0 0
    %1121 = vmatpush2.bf16.msra.mxu0 0
    %1122 = vmatprep.subr.bf16.mxu0 0
    %1123 = vmatpush2.bf16.msra.mxu0 0
    %1124 = vmatprep.subr.bf16.mxu0 0
    %1125 = vmatpush2.bf16.msra.mxu0 0
    %1126 = vmatprep.subr.bf16.mxu0 0
    %1127 = vmatpush2.bf16.msra.mxu0 0
    %1128 = vmatprep.subr.bf16.mxu0 0
    %1129 = vmatpush2.bf16.msra.mxu0 0
    %1130 = vmatprep.subr.bf16.mxu0 0
    %1131 = vmatpush2.bf16.msra.mxu0 0
    %1132 = vmatprep.subr.bf16.mxu0 0
    %1133 = vmatpush2.bf16.msra.mxu0 0
    %1134 = vmatprep.subr.bf16.mxu0 0
    %1135 = vmatpush2.bf16.msra.mxu0 0
    %1136 = vmatprep.mubr.bf16.mxu0 0
    %1137 = vmatmul.mubr.bf16.gmra.mxu0 %v1102
    %v1138 = vpop.f32.mrf.mxu0
    %v1139 = vadd.f32 0.0, %v1138
    %v1140 = vpop.f32.mrf.mxu0
    %v1141 = vpop.f32.mrf.mxu0
    %v1142 = vadd.f32 0.0, %v1141
    %v1143 = vpop.f32.mrf.mxu0
    %1144 = vdwg.mxu0
    %1146 = vrot.lane.b32.xlu0 %v218, 64
    %v1147 = vpop.permute.xlu0 %1146
    %v1150 = vsel %vm672, %v855, 0
    %1152 = vmatprep.subr.bf16.mxu0 0
    %1153 = vmatpush1.bf16.msra.mxu0 0
    %1154 = vmatprep.subr.bf16.mxu0 0
    %1155 = vmatpush1.bf16.msra.mxu0 0
    %1156 = vmatprep.subr.bf16.mxu0 0
    %1157 = vmatpush1.bf16.msra.mxu0 0
    %1158 = vmatprep.subr.bf16.mxu0 0
    %1159 = vmatpush1.bf16.msra.mxu0 0
    %1160 = vmatprep.subr.bf16.mxu0 0
    %1161 = vmatpush1.bf16.msra.mxu0 0
    %1162 = vmatprep.subr.bf16.mxu0 0
    %1163 = vmatpush1.bf16.msra.mxu0 0
    %1164 = vmatprep.subr.bf16.mxu0 0
    %1165 = vmatpush1.bf16.msra.mxu0 0
    %1166 = vmatprep.subr.bf16.mxu0 0
    %1167 = vmatpush1.bf16.msra.mxu0 %v1147
    %1168 = vmatprep.subr.bf16.mxu0 0
    %1169 = vmatpush2.bf16.msra.mxu0 0
    %1170 = vmatprep.subr.bf16.mxu0 0
    %1171 = vmatpush2.bf16.msra.mxu0 0
    %1172 = vmatprep.subr.bf16.mxu0 0
    %1173 = vmatpush2.bf16.msra.mxu0 0
    %1174 = vmatprep.subr.bf16.mxu0 0
    %1175 = vmatpush2.bf16.msra.mxu0 0
    %1176 = vmatprep.subr.bf16.mxu0 0
    %1177 = vmatpush2.bf16.msra.mxu0 0
    %1178 = vmatprep.subr.bf16.mxu0 0
    %1179 = vmatpush2.bf16.msra.mxu0 0
    %1180 = vmatprep.subr.bf16.mxu0 0
    %1181 = vmatpush2.bf16.msra.mxu0 0
    %1182 = vmatprep.subr.bf16.mxu0 0
    %1183 = vmatpush2.bf16.msra.mxu0 0
    %1184 = vmatprep.mubr.bf16.mxu0 0
    %1185 = vmatmul.mubr.bf16.gmra.mxu0 %v1150
    %v1186 = vpop.f32.mrf.mxu0
    %v1187 = vadd.f32 0.0, %v1186
    %v1188 = vpop.f32.mrf.mxu0
    %v1189 = vpop.f32.mrf.mxu0
    %v1190 = vadd.f32 0.0, %v1189
    %v1191 = vpop.f32.mrf.mxu0
    %1192 = vdwg.mxu0
    %1194 = vrot.lane.b32.xlu0 %v219, 64
    %v1195 = vpop.permute.xlu0 %1194
    %v1198 = vsel %vm672, %v856, 0
    %1200 = vmatprep.subr.bf16.mxu0 0
    %1201 = vmatpush1.bf16.msra.mxu0 0
    %1202 = vmatprep.subr.bf16.mxu0 0
    %1203 = vmatpush1.bf16.msra.mxu0 0
    %1204 = vmatprep.subr.bf16.mxu0 0
    %1205 = vmatpush1.bf16.msra.mxu0 0
    %1206 = vmatprep.subr.bf16.mxu0 0
    %1207 = vmatpush1.bf16.msra.mxu0 0
    %1208 = vmatprep.subr.bf16.mxu0 0
    %1209 = vmatpush1.bf16.msra.mxu0 0
    %1210 = vmatprep.subr.bf16.mxu0 0
    %1211 = vmatpush1.bf16.msra.mxu0 0
    %1212 = vmatprep.subr.bf16.mxu0 0
    %1213 = vmatpush1.bf16.msra.mxu0 0
    %1214 = vmatprep.subr.bf16.mxu0 0
    %1215 = vmatpush1.bf16.msra.mxu0 %v1195
    %1216 = vmatprep.subr.bf16.mxu0 0
    %1217 = vmatpush2.bf16.msra.mxu0 0
    %1218 = vmatprep.subr.bf16.mxu0 0
    %1219 = vmatpush2.bf16.msra.mxu0 0
    %1220 = vmatprep.subr.bf16.mxu0 0
    %1221 = vmatpush2.bf16.msra.mxu0 0
    %1222 = vmatprep.subr.bf16.mxu0 0
    %1223 = vmatpush2.bf16.msra.mxu0 0
    %1224 = vmatprep.subr.bf16.mxu0 0
    %1225 = vmatpush2.bf16.msra.mxu0 0
    %1226 = vmatprep.subr.bf16.mxu0 0
    %1227 = vmatpush2.bf16.msra.mxu0 0
    %1228 = vmatprep.subr.bf16.mxu0 0
    %1229 = vmatpush2.bf16.msra.mxu0 0
    %1230 = vmatprep.subr.bf16.mxu0 0
    %1231 = vmatpush2.bf16.msra.mxu0 0
    %1232 = vmatprep.mubr.bf16.mxu0 0
    %1233 = vmatmul.mubr.bf16.gmra.mxu0 %v1198
    %v1234 = vpop.f32.mrf.mxu0
    %v1235 = vadd.f32 0.0, %v1234
    %v1236 = vpop.f32.mrf.mxu0
    %v1237 = vpop.f32.mrf.mxu0
    %v1238 = vadd.f32 0.0, %v1237
    %v1239 = vpop.f32.mrf.mxu0
    %1240 = vdwg.mxu0
    %1241 = vst.msk [vmem:[#allocation5] sm:$0xff] %vm247, %v899
    %1242 = vst.msk [vmem:[#allocation5 + $0x8] sm:$0xff] %vm247, %v902
    %1243 = vst.msk [vmem:[#allocation5 + $0x10] sm:$0xff] %vm247, %v947
    %1244 = vst.msk [vmem:[#allocation5 + $0x18] sm:$0xff] %vm247, %v950
    %1245 = vst.msk [vmem:[#allocation5 + $0x20] sm:$0xff] %vm247, %v995
    %1246 = vst.msk [vmem:[#allocation5 + $0x28] sm:$0xff] %vm247, %v998
    %1247 = vst.msk [vmem:[#allocation5 + $0x30] sm:$0xff] %vm247, %v1043
    %1248 = vst.msk [vmem:[#allocation5 + $0x38] sm:$0xff] %vm247, %v1046
    %1249 = vst.msk [vmem:[#allocation5 + $0x40] sm:$0xff] %vm247, %v1091
    %1250 = vst.msk [vmem:[#allocation5 + $0x48] sm:$0xff] %vm247, %v1094
    %1251 = vst.msk [vmem:[#allocation5 + $0x50] sm:$0xff] %vm247, %v1139
    %1252 = vst.msk [vmem:[#allocation5 + $0x58] sm:$0xff] %vm247, %v1142
    %1253 = vst.msk [vmem:[#allocation5 + $0x60] sm:$0xff] %vm247, %v1187
    %1254 = vst.msk [vmem:[#allocation5 + $0x68] sm:$0xff] %vm247, %v1190
    %1255 = vst.msk [vmem:[#allocation5 + $0x70] sm:$0xff] %vm247, %v1235
    %1256 = vst.msk [vmem:[#allocation5 + $0x78] sm:$0xff] %vm247, %v1238
    // Predicated region
    $region14: #{_head_forward_impl.1} parent=1 // pred_check
      _
    $region15: #{_head_forward_impl.1} parent=1 // pred_check_branch
      %1258 = sbr.rel (0) target = $region17
    $region16: #{_head_forward_impl.1} parent=1 // pred_region
      %s1260 = ssub.s32 2048, 2048
      %1261 = vsyncadd [#allocation4], %s1260
      %s1262 = sshll.u32 [#allocation5], 4
      %s1263 = int_to_ptr.vmem [resolvable:$true] %s1262
      %1268 = dma.vmem_to_hbm [thread:$0]  %s1263, 2048, %s2, [#allocation4], 128, 128, 8
    $region17: #{_head_forward_impl.1} parent=1 // pred_fallthru
      _
    // Predicated region
    $region18: #{_head_forward_impl.1} parent=1 // pred_check
      _
    $region19: #{_head_forward_impl.1} parent=1 // pred_check_branch
      %1270 = sbr.rel (0) target = $region21
    $region20: #{_head_forward_impl.1} parent=1 // pred_region
      %1271 = dma.done [#allocation4], 2048
    $region21: #{_head_forward_impl.1} parent=1 // pred_fallthru
      _
    %1272 = vsyncpa [#allocation3], 1
    %1273 = vsyncpa [#allocation4], 1

</llo_original>
